<compile_context>
chip_gen: v7x
topology: tpu7x:2x2x1
jax: 0.10.0
libtpu: 0.0.40
codegen_flags: <defaults>
</compile_context>

<pallas_src>
import jax
import jax.numpy as jnp
from jax.experimental import pallas as pl
from jax.experimental.pallas import tpu as pltpu


def _identity_kernel(x_ref, o_ref):
    # Elementwise identity on the current VMEM tile.
    o_ref[...] = x_ref[...]


_TARGET_BLOCK_BYTES = 2 * 1024 * 1024          # ~2 MiB per block
_LANE_WIDTHS = (8192, 4096, 2048, 1024, 512, 256, 128)


def _lane_dense_layout(total, itemsize):
    """Pick (rows, cols): cols is the largest multiple of 128 dividing `total`
    that still leaves at least a full sublane group of rows."""
    sub_mult = 8 * max(1, 4 // itemsize)       # 8 for f32, 16 for bf16, 32 for int8
    fallback = None
    for lane_w in _LANE_WIDTHS:
        if total % lane_w == 0:
            rows = total // lane_w
            if fallback is None:
                fallback = (rows, lane_w)      # largest divisor (may have <8 rows)
            if rows >= sub_mult:
                return (rows, lane_w), sub_mult
    if fallback is not None:
        return fallback, sub_mult
    # Tiny / irregular element count: one full-extent block.
    return (1, total), sub_mult


def identity(x):
    """Pallas TPU identity: returns x unchanged (bit-exact), NCHW or any shape."""
    orig_shape = x.shape
    orig_dtype = x.dtype
    total = int(x.size)

    if total == 0:
        return x

    itemsize = jnp.dtype(orig_dtype).itemsize
    (rows, cols), sub_mult = _lane_dense_layout(total, itemsize)
    x2 = x.reshape(rows, cols)                 # contiguous reshape: free at XLA level

    # Byte-budgeted row tile (kept a multiple of the sublane packing requirement).
    bytes_per_row = cols * itemsize
    rows_budget = max(1, _TARGET_BLOCK_BYTES // bytes_per_row)
    if rows_budget >= rows:
        tile_r = rows                          # full extent — always a legal block
    else:
        tile_r = max(sub_mult, (rows_budget // sub_mult) * sub_mult)
        tile_r = min(tile_r, rows)

    grid = (pl.cdiv(rows, tile_r),)

    out2 = pl.pallas_call(
        _identity_kernel,
        out_shape=jax.ShapeDtypeStruct((rows, cols), orig_dtype),
        grid_spec=pltpu.PrefetchScalarGridSpec(
            num_scalar_prefetch=0,
            grid=grid,
            in_specs=[pl.BlockSpec((tile_r, cols), lambda i: (i, 0))],
            out_specs=pl.BlockSpec((tile_r, cols), lambda i: (i, 0)),
        ),
        # Alias input -> output: avoids a fresh HBM output allocation; with a
        # donated caller buffer this removes the extra HBM write entirely.
        input_output_aliases={0: 0},
        compiler_params=pltpu.CompilerParams(
            dimension_semantics=("parallel",),   # lets v7x shard the copy across its 2 TCs
        ),
    )(x2)

    return out2.reshape(orig_shape)


if __name__ == "__main__":
    key = jax.random.PRNGKey(0)
    # Small NCHW input consistent with a conv-style module: batch=2, C=4, 16x16.
    x = jax.random.normal(key, (2, 4, 16, 16), dtype=jnp.float32)

    # Host copy for comparison: the pallas_call aliases (donates) its flattened
    # input buffer, so compare against a saved copy rather than device state.
    x_host = jax.device_get(x)

    y = identity(x)
    y = jax.block_until_ready(y)
    y_host = jax.device_get(y)

    assert y.shape == x_host.shape, (y.shape, x_host.shape)
    assert str(y.dtype) == str(x_host.dtype), (y.dtype, x_host.dtype)
    assert bool((y_host == x_host).all()), "identity output mismatch"

    print("KERNEL_OK")
</pallas_src>

<mosaic_0001>
module attributes {stable_mosaic.version = 11 : i64} {
  func.func @_identity_kernel(%arg0: i32, %arg1: memref<8x256xf32, #tpu.memory_space<vmem>>, %arg2: memref<8x256xf32, #tpu.memory_space<vmem>>) attributes {dimension_semantics = [#tpu.dimension_semantics<parallel>], iteration_bounds = array<i64: 1>, scalar_prefetch = 0 : i64, scratch_operands = 0 : i64, tpu.core_type = #tpu.core_type<tc>, window_params = [{transform_indices = @transform_0, window_bounds = array<i64: 8, 256>}, {transform_indices = @transform_1, window_bounds = array<i64: 8, 256>}]} {
    %c0 = arith.constant 0 : index
    %c0_0 = arith.constant 0 : index
    %0 = vector.load %arg1[%c0, %c0_0] : memref<8x256xf32, #tpu.memory_space<vmem>>, vector<8x256xf32>
    %c0_1 = arith.constant 0 : index
    %c0_2 = arith.constant 0 : index
    %1 = vector.load %arg2[%c0_1, %c0_2] : memref<8x256xf32, #tpu.memory_space<vmem>>, vector<8x256xf32>
    tpu.vector_store %arg2[%c0_1, %c0_2], %0 {strides = array<i32>} : memref<8x256xf32, #tpu.memory_space<vmem>>, vector<8x256xf32>,
    return
  }
  func.func @transform_0(%arg0: i32) -> (i32, i32) {
    %c0_i32 = arith.constant 0 : i32
    %c0_i32_0 = arith.constant 0 : i32
    return %arg0, %c0_i32 : i32, i32
  }
  func.func @transform_1(%arg0: i32) -> (i32, i32) {
    %c0_i32 = arith.constant 0 : i32
    %c0_i32_0 = arith.constant 0 : i32
    return %arg0, %c0_i32 : i32, i32
  }
}

</mosaic_0001>

<llo_original>
// kernel: tpu_custom_call.1
$region0: #{tpu_custom_call.1}
  #allocation0 [shape = 'u32[]', space=smem, size = 0x4, offset = 0x4, fixed_abs, tag = 'smem constant byte address 0x4 - core index']
  #allocation1 [shape = 'u32[144,128]{1,0:T(1,128)}', space=vmem, size = 0x12000, scoped, tag = 'internal scratch']
  %s0 = inlined_call_operand.hbm [shape: f32[8,256], index: 0, kind: input, shape index: {}, may-alias: {0,1}]
  %s1 = inlined_call_operand.hbm [shape: f32[8,256], index: 1, kind: output, shape index: {}, may-alias: {0,1}]
  %s2 = sld [smem:[#allocation0]]
  $region18: #{tpu_custom_call.1} parent=0
    _
  %s4 = ssub.s32 1, %s2
  %s5 = scalar_select 0, %s4, %s2
  $region1: #{tpu_custom_call.1} parent=0
    #allocation2 [shape = 'u8[8192]{0}', space=vmem, size = 0x2000, scoped, tag = 'input window, operand 0, single buffered']
    #allocation3 [shape = 's32[1]{0}', space=sflag, size = 0x4, scoped, tag = 'scoped memory for tpu_custom_call.1']
    #allocation4 [shape = 's32[1]{0}', space=sflag, size = 0x4, scoped, tag = 'scoped memory for tpu_custom_call.1']
    #allocation5 [shape = 'u8[8192]{0}', space=vmem, size = 0x2000, scoped, tag = 'output window, operand 0, single buffered']
    %6 = vsyncpa [#allocation3], 0
    %7 = vsyncpa [#allocation4], 0
    // Predicated region
    $region2: #{tpu_custom_call.1} parent=1 // pred_check
      _
    $region3: #{tpu_custom_call.1} parent=1 // pred_check_branch
      %9 = sbr.rel (0) target = $region5
    $region4: #{tpu_custom_call.1} parent=1 // pred_region
      %s11 = ssub.s32 256, 256
      %12 = vsyncadd [#allocation3], %s11
      %s14 = sshll.u32 [#allocation2], 4
      %s15 = int_to_ptr.vmem [resolvable:$true] %s14
      %17 = dma.hbm_to_vmem [thread:$0]  %s0, 256, %s15, [#allocation3]
    $region5: #{tpu_custom_call.1} parent=1 // pred_fallthru
      _
    // Predicated region
    $region6: #{tpu_custom_call.1} parent=1 // pred_check
      _
    $region7: #{tpu_custom_call.1} parent=1 // pred_check_branch
      %19 = sbr.rel (0) target = $region9
    $region8: #{tpu_custom_call.1} parent=1 // pred_region
      %20 = dma.done [#allocation3], 256
    $region9: #{tpu_custom_call.1} parent=1 // pred_fallthru
      _
    %v21 = vld [vmem:[#allocation2] sm:$0xff]
    %v22 = vld [vmem:[#allocation2 + $0x8] sm:$0xff]
    %23 = vst [vmem:[#allocation5] sm:$0xff] %v21
    %24 = vst [vmem:[#allocation5 + $0x8] sm:$0xff] %v22
    // Predicated region
    $region10: #{tpu_custom_call.1} parent=1 // pred_check
      _
    $region11: #{tpu_custom_call.1} parent=1 // pred_check_branch
      %26 = sbr.rel (0) target = $region13
    $region12: #{tpu_custom_call.1} parent=1 // pred_region
      %s28 = ssub.s32 256, 256
      %29 = vsyncadd [#allocation4], %s28
      %s31 = sshll.u32 [#allocation5], 4
      %s32 = int_to_ptr.vmem [resolvable:$true] %s31
      %34 = dma.vmem_to_hbm [thread:$0]  %s32, 256, %s1, [#allocation4]
    $region13: #{tpu_custom_call.1} parent=1 // pred_fallthru
      _
    // Predicated region
    $region14: #{tpu_custom_call.1} parent=1 // pred_check
      _
    $region15: #{tpu_custom_call.1} parent=1 // pred_check_branch
      %36 = sbr.rel (0) target = $region17
    $region16: #{tpu_custom_call.1} parent=1 // pred_region
      %37 = dma.done [#allocation4], 256
    $region17: #{tpu_custom_call.1} parent=1 // pred_fallthru
      _
    %38 = vsyncpa [#allocation3], 1
    %39 = vsyncpa [#allocation4], 1

</llo_original>
